<compile_context>
chip_gen: v7x
topology: tpu7x:2x2x1
jax: 0.10.0
libtpu: 0.0.40
codegen_flags: <defaults>
</compile_context>

<pallas_src>
import jax
import jax.numpy as jnp
from jax.experimental import pallas as pl
from jax.experimental.pallas import tpu as pltpu


def _round_up(x, m):
    return ((x + m - 1) // m) * m


def _vmem_capacity_bytes():
    try:
        return int(pltpu.get_tpu_info().vmem_capacity_bytes)
    except Exception:
        return 64 << 20  # conservative fallback (v7x per-TensorCore VMEM)


def _make_kernel(act_fn):
    def kernel(x_ref, w_ref, b_ref, o_ref):
        # x_ref: (tm, K) f32   w_ref: (K, tf) bf16   b_ref: (1, tf) f32   o_ref: (tm, tf)
        # Cast the node-feature tile to bf16 *inside* the kernel (fused with the HBM read;
        # no separate pad/cast pre-pass over x) and accumulate on the MXU in f32.
        h = jnp.dot(x_ref[...].astype(jnp.bfloat16), w_ref[...],
                    preferred_element_type=jnp.float32)
        h = h + b_ref[...]                      # bias broadcast over rows (f32)
        o_ref[...] = act_fn(h).astype(o_ref.dtype)
    return kernel


def node_apply(x, w, b, *, activation=jax.nn.relu, out_dtype=None):
    """h = activation(x @ w + b)   (NodeApplyModule.forward applied to node.data['h']).

    x: (N, in_feats) f32, w: (in_feats, out_feats) f32, b: (out_feats,) f32.
    `activation` is any elementwise jnp-compatible callable (default ReLU).
    `out_dtype` defaults to x.dtype (f32 nn.Linear contract); pass jnp.bfloat16 to halve
    the output HBM stream when stacking GCN layers.
    """
    N, K = x.shape
    assert w.shape[0] == K
    F = w.shape[1]
    out_dtype = x.dtype if out_dtype is None else out_dtype
    x_item = jnp.dtype(x.dtype).itemsize
    out_item = jnp.dtype(out_dtype).itemsize

    # Tiny one-off casts / reshapes (K*F and F elements; x itself is never touched).
    w_b = w.astype(jnp.bfloat16)
    b2 = b.astype(jnp.float32).reshape(1, F)

    # ---- Generation-aware VMEM budget ---------------------------------------
    vmem_cap = _vmem_capacity_bytes()
    two_core_hint = vmem_cap <= (64 << 20)              # v7x-like: 64 MiB VMEM, 2 TCs/chip
    budget = min(int(vmem_cap * 0.55), 80 << 20)        # for tile sizing
    vmem_limit = min(int(vmem_cap * 0.75), 100 << 20)   # scoped limit handed to Mosaic

    # ---- F (output-feature) tiling ------------------------------------------
    # Keep the resident weight block well under budget; a ragged last F block is safe
    # (out-of-range columns are masked on the output store).
    if K * F * 2 + F * 4 <= budget // 2:
        tf, nf = F, 1
    else:
        tf = 512
        while tf > 128 and K * tf * 2 > budget // 2:
            tf //= 2
        nf = pl.cdiv(F, tf)
    # TODO(synk): add a K ("arbitrary") reduction axis with an f32 accumulator for in_feats
    # so large that even a (K, 128) weight block exceeds the VMEM budget.

    # ---- Row tile sized from the per-row VMEM cost ---------------------------
    # x tile (double-buffered f32) + in-kernel bf16 copy + out tile (double-buffered)
    # + f32 intermediate.
    per_row = 2 * K * x_item + 2 * K + 2 * tf * out_item + 4 * tf
    w_bufs = 1 if nf == 1 else 2
    fixed = w_bufs * (K * tf * 2 + 4 * tf)
    tm_cap = max(8, (budget - fixed) // per_row) if budget > fixed else 8
    tm = min(1024 if two_core_hint else 2048, int(tm_cap))
    tm = max(8, (tm // 8) * 8)
    tm = min(tm, _round_up(N, 8))          # never pad a tiny graph up to a huge tile

    # v7x megacore: give both TensorCores (roughly) equal work. Skipped on v5e/v6e where a
    # single larger tile is strictly better (1 TC per chip).
    if two_core_hint and N > 16:
        n_par = pl.cdiv(N, tm) * nf
        if n_par % 2 == 1:
            tm = max(8, _round_up(pl.cdiv(N, pl.cdiv(N, tm) + 1), 8))

    nrow = pl.cdiv(N, tm)
    grid = (nrow, nf)

    # Grid-invariant operands (nf == 1) only need a single VMEM buffer.
    const_mode = {} if nf > 1 else dict(pipeline_mode=pl.Buffered(1))

    cost = pl.CostEstimate(
        flops=2 * N * K * F,
        transcendentals=0,
        bytes_accessed=int(x_item * N * K + 2 * K * F + 4 * F + out_item * N * F),
    )

    return pl.pallas_call(
        _make_kernel(activation),
        out_shape=jax.ShapeDtypeStruct((N, F), out_dtype),
        grid_spec=pltpu.PrefetchScalarGridSpec(
            num_scalar_prefetch=0,
            grid=grid,
            in_specs=[
                pl.BlockSpec((tm, K), lambda i, j: (i, 0)),                 # node features (f32)
                pl.BlockSpec((K, tf), lambda i, j: (0, j), **const_mode),   # weights (bf16)
                pl.BlockSpec((1, tf), lambda i, j: (0, j), **const_mode),   # bias (f32)
            ],
            out_specs=pl.BlockSpec((tm, tf), lambda i, j: (i, j)),
        ),
        compiler_params=pltpu.CompilerParams(
            dimension_semantics=("parallel", "parallel"),
            vmem_limit_bytes=vmem_limit,
        ),
        cost_estimate=cost,
    )(x, w_b, b2)


if __name__ == "__main__":
    key = jax.random.PRNGKey(0)

    def run_case(N, in_feats, out_feats, case_key):
        kx, kw, kb = jax.random.split(case_key, 3)
        bound = 1.0 / (in_feats ** 0.5)   # PyTorch nn.Linear default init range
        x = jax.random.normal(kx, (N, in_feats), dtype=jnp.float32)
        w = jax.random.uniform(kw, (in_feats, out_feats), minval=-bound, maxval=bound,
                               dtype=jnp.float32)
        b = jax.random.uniform(kb, (out_feats,), minval=-bound, maxval=bound,
                               dtype=jnp.float32)

        h = node_apply(x, w, b)
        jax.block_until_ready(h)
        assert h.shape == (N, out_feats)
        assert h.dtype == x.dtype

        # True f32 reference (nn.Linear + ReLU); bf16 MXU inputs give ~1e-3 relative error.
        h_ref = jnp.maximum(
            jnp.dot(x, w, precision=jax.lax.Precision.HIGHEST) + b[None, :], 0.0)
        assert jnp.allclose(h, h_ref, atol=3e-2, rtol=3e-2), \
            float(jnp.max(jnp.abs(h - h_ref)))
        return h

    k1, k2 = jax.random.split(key)
    run_case(200, 80, 96, k1)   # ragged rows + sub-128 feature dims (masked stores)
    run_case(13, 40, 24, k2)    # tiny graph: exercises the small-N tile clamp + row masking
    print("KERNEL_OK")
</pallas_src>

<mosaic_0001>
module attributes {stable_mosaic.version = 11 : i64} {
  func.func @kernel(%arg0: i32, %arg1: i32, %arg2: memref<104x80xf32, #tpu.memory_space<vmem>>, %arg3: memref<80x96xbf16, #tpu.memory_space<vmem>>, %arg4: memref<1x96xf32, #tpu.memory_space<vmem>>, %arg5: memref<104x96xf32, #tpu.memory_space<vmem>>) attributes {dimension_semantics = [#tpu.dimension_semantics<parallel>, #tpu.dimension_semantics<parallel>], iteration_bounds = array<i64: 2, 1>, scalar_prefetch = 0 : i64, scratch_operands = 0 : i64, tpu.core_type = #tpu.core_type<tc>, window_params = [{transform_indices = @transform_0, window_bounds = array<i64: 104, 80>}, {pipeline_mode = #tpu.pipeline_mode<synchronous>, transform_indices = @transform_1, window_bounds = array<i64: 80, 96>}, {pipeline_mode = #tpu.pipeline_mode<synchronous>, transform_indices = @transform_2, window_bounds = array<i64: 1, 96>}, {transform_indices = @transform_3, window_bounds = array<i64: 104, 96>}]} {
    %c0 = arith.constant 0 : index
    %c0_0 = arith.constant 0 : index
    %0 = vector.load %arg2[%c0, %c0_0] : memref<104x80xf32, #tpu.memory_space<vmem>>, vector<104x80xf32>
    %1 = arith.truncf %0 : vector<104x80xf32> to vector<104x80xbf16>
    %c0_1 = arith.constant 0 : index
    %c0_2 = arith.constant 0 : index
    %2 = vector.load %arg3[%c0_1, %c0_2] : memref<80x96xbf16, #tpu.memory_space<vmem>>, vector<80x96xbf16>
    %cst = arith.constant dense<0.000000e+00> : vector<104x96xf32>
    %3 = tpu.matmul %1, %2, %cst {dimension_numbers = #tpu.dot_dimension_numbers<[1], [0], [0], [1], [0, 0, 1, 1], [], []>} : vector<104x80xbf16>, vector<80x96xbf16>, vector<104x96xf32> -> vector<104x96xf32>
    %c0_3 = arith.constant 0 : index
    %c0_4 = arith.constant 0 : index
    %4 = vector.load %arg4[%c0_3, %c0_4] : memref<1x96xf32, #tpu.memory_space<vmem>>, vector<1x96xf32>
    %5 = vector.broadcast %4 : vector<1x96xf32> to vector<104x96xf32>
    %6 = arith.addf %3, %5 : vector<104x96xf32>
    %cst_5 = arith.constant 0.000000e+00 : f32
    %7 = vector.broadcast %cst_5 : f32 to vector<104x96xf32>
    %8 = arith.maximumf %6, %7 : vector<104x96xf32>
    %c0_6 = arith.constant 0 : index
    %c0_7 = arith.constant 0 : index
    %9 = vector.load %arg5[%c0_6, %c0_7] : memref<104x96xf32, #tpu.memory_space<vmem>>, vector<104x96xf32>
    tpu.vector_store %arg5[%c0_6, %c0_7], %8 {strides = array<i32>} : memref<104x96xf32, #tpu.memory_space<vmem>>, vector<104x96xf32>,
    return
  }
  func.func @transform_0(%arg0: i32, %arg1: i32) -> (i32, i32) {
    %c0_i32 = arith.constant 0 : i32
    %c0_i32_0 = arith.constant 0 : i32
    return %arg0, %c0_i32 : i32, i32
  }
  func.func @transform_1(%arg0: i32, %arg1: i32) -> (i32, i32) {
    %c0_i32 = arith.constant 0 : i32
    %c0_i32_0 = arith.constant 0 : i32
    return %c0_i32, %arg1 : i32, i32
  }
  func.func @transform_2(%arg0: i32, %arg1: i32) -> (i32, i32) {
    %c0_i32 = arith.constant 0 : i32
    %c0_i32_0 = arith.constant 0 : i32
    return %c0_i32, %arg1 : i32, i32
  }
  func.func @transform_3(%arg0: i32, %arg1: i32) -> (i32, i32) {
    %c0_i32 = arith.constant 0 : i32
    return %arg0, %arg1 : i32, i32
  }
}

</mosaic_0001>

<llo_original>
// kernel: tpu_custom_call.1
$region0: #{tpu_custom_call.1}
  #allocation0 [shape = 'u32[]', space=smem, size = 0x4, offset = 0x4, fixed_abs, tag = 'smem constant byte address 0x4 - core index']
  #allocation1 [shape = 'u32[144,128]{1,0:T(1,128)}', space=vmem, size = 0x12000, scoped, tag = 'internal scratch']
  %s0 = inlined_call_operand.vmem [shape: f32[200,80], index: 0, kind: input, shape index: {}]
  %s1 = inlined_call_operand.vmem [shape: bf16[80,96], index: 1, kind: input, shape index: {}]
  %s2 = inlined_call_operand.vmem [shape: f32[1,96], index: 2, kind: input, shape index: {}]
  %s3 = inlined_call_operand.vmem [shape: f32[200,96], index: 3, kind: output, shape index: {}]
  %s4 = sld [smem:[#allocation0]]
  $region93: #{tpu_custom_call.1} parent=0
    _
  %s6 = ssub.s32 1, %s4
  %s7 = scalar_select 0, %s6, %s4
  $region1: #{tpu_custom_call.1} parent=0
    #allocation2 [shape = 'u8[106496]{0}', space=vmem, size = 0x1a000, scoped, tag = 'output window, operand 0']
    loop: start=0, step=1, limit=4
    $region2: #{tpu_custom_call.1} parent=1 // loop_pre_header
      _
    $region3: #{tpu_custom_call.1} parent=1 // loop_header
      %s9 = sphi 0, %s13
      %p10 = scmp.ge.s32.totalorder %s9, 4
      %s16 = sphi 0, %s28
      %s17 = sphi 0, %s24
      %s18 = sphi 0, %s16
      %s19 = sphi 0, %s17
      %s20 = sphi 0, %s18
      %s21 = sphi 0, %s19
      %s31 = sphi 0, %s33
      %s34 = sphi 0, %s31
      %s35 = sphi 0, %s34
      %s51 = sphi 0, %s35
      %s57 = sphi 0, %s59
      %s60 = sphi 0, %s57
      %s61 = sphi 0, %s60
      %s77 = sphi 0, %s61
      %s83 = sphi 0, %s85
      %s86 = sphi 0, %s83
      %s87 = sphi 0, %s86
      %s103 = sphi 0, %s87
      %s111 = sphi 0, %s113
      %s114 = sphi 0, %s111
      %s115 = sphi 0, %s114
      %s131 = sphi 0, %s115
    $region4: #{tpu_custom_call.1} parent=1 // loop_header_branch
      %12 = sbr.rel (%p10) target = $region8
    $region5: #{tpu_custom_call.1} parent=1 // loop_body
      %s14 = ssub.s32 %s9, 1
      %s15 = ssub.s32 %s9, 2
      %s22 = sadd.s32 1, %s17
      %p23 = scmp.ge.s32.totalorder %s22, 1
      %s24 = scalar_select %p23, 0, %s22
      %s25 = sadd.s32 1, %s16
      %s26 = scalar_select %p23, %s25, %s16
      %p27 = scmp.ge.s32.totalorder %s26, 2
      %s28 = scalar_select %p27, 0, %s26
      %s29 = ssub.s32 %s16, %s28
      %p30 = scmp.eq.s32.totalorder %s29, 0
      %s32 = sadd.s32 %s31, 1
      %s33 = scalar_select %p30, %s31, %s32
      %p36 = pneg %p30
      %p37 = scmp.eq.s32.totalorder %s9, 1
      %p38 = por %p36, %p37
      %p39 = scmp.ne.s32.totalorder %s31, %s34
      %p40 = scmp.eq.s32.totalorder %s9, 0
      %p41 = por %p39, %p40
      %p42 = scmp.ne.s32.totalorder %s31, %s34
      %p43 = scmp.eq.s32.totalorder %s14, 1
      %p44 = por %p42, %p43
      %p45 = scmp.ne.s32.totalorder %s34, %s35
      %p46 = scmp.eq.s32.totalorder %s14, 0
      %p47 = por %p45, %p46
      %p48 = scmp.ne.s32.totalorder %s34, %s35
      %p49 = scmp.eq.s32.totalorder %s15, 1
      %p50 = por %p48, %p49
      %p52 = scmp.ne.s32.totalorder %s35, %s51
      %p53 = scmp.eq.s32.totalorder %s15, 0
      %p54 = por %p52, %p53
      %s55 = ssub.s32 %s17, %s24
      %p56 = scmp.eq.s32.totalorder %s55, 0
      %s58 = sadd.s32 %s57, 1
      %s59 = scalar_select %p56, %s57, %s58
      %p62 = pneg %p56
      %p63 = scmp.eq.s32.totalorder %s9, 1
      %p64 = por %p62, %p63
      %p65 = scmp.ne.s32.totalorder %s57, %s60
      %p66 = scmp.eq.s32.totalorder %s9, 0
      %p67 = por %p65, %p66
      %p68 = scmp.ne.s32.totalorder %s57, %s60
      %p69 = scmp.eq.s32.totalorder %s14, 1
      %p70 = por %p68, %p69
      %p71 = scmp.ne.s32.totalorder %s60, %s61
      %p72 = scmp.eq.s32.totalorder %s14, 0
      %p73 = por %p71, %p72
      %p74 = scmp.ne.s32.totalorder %s60, %s61
      %p75 = scmp.eq.s32.totalorder %s15, 1
      %p76 = por %p74, %p75
      %p78 = scmp.ne.s32.totalorder %s61, %s77
      %p79 = scmp.eq.s32.totalorder %s15, 0
      %p80 = por %p78, %p79
      %s81 = ssub.s32 %s17, %s24
      %p82 = scmp.eq.s32.totalorder %s81, 0
      %s84 = sadd.s32 %s83, 1
      %s85 = scalar_select %p82, %s83, %s84
      %p88 = pneg %p82
      %p89 = scmp.eq.s32.totalorder %s9, 1
      %p90 = por %p88, %p89
      %p91 = scmp.ne.s32.totalorder %s83, %s86
      %p92 = scmp.eq.s32.totalorder %s9, 0
      %p93 = por %p91, %p92
      %p94 = scmp.ne.s32.totalorder %s83, %s86
      %p95 = scmp.eq.s32.totalorder %s14, 1
      %p96 = por %p94, %p95
      %p97 = scmp.ne.s32.totalorder %s86, %s87
      %p98 = scmp.eq.s32.totalorder %s14, 0
      %p99 = por %p97, %p98
      %p100 = scmp.ne.s32.totalorder %s86, %s87
      %p101 = scmp.eq.s32.totalorder %s15, 1
      %p102 = por %p100, %p101
      %p104 = scmp.ne.s32.totalorder %s87, %s103
      %p105 = scmp.eq.s32.totalorder %s15, 0
      %p106 = por %p104, %p105
      %s107 = ssub.s32 %s16, %s28
      %s108 = ssub.s32 %s17, %s24
      %s109 = sor.u32 %s107, %s108
      %p110 = scmp.eq.s32.totalorder %s109, 0
      %s112 = sadd.s32 %s111, 1
      %s113 = scalar_select %p110, %s111, %s112
      %p116 = pneg %p110
      %p117 = scmp.eq.s32.totalorder %s9, 1
      %p118 = por %p116, %p117
      %p119 = scmp.ne.s32.totalorder %s111, %s114
      %p120 = scmp.eq.s32.totalorder %s9, 0
      %p121 = por %p119, %p120
      %p122 = scmp.ne.s32.totalorder %s111, %s114
      %p123 = scmp.eq.s32.totalorder %s14, 1
      %p124 = por %p122, %p123
      %p125 = scmp.ne.s32.totalorder %s114, %s115
      %p126 = scmp.eq.s32.totalorder %s14, 0
      %p127 = por %p125, %p126
      %p128 = scmp.ne.s32.totalorder %s114, %s115
      %p129 = scmp.eq.s32.totalorder %s15, 1
      %p130 = por %p128, %p129
      %p132 = scmp.ne.s32.totalorder %s115, %s131
      %p133 = scmp.eq.s32.totalorder %s15, 0
      %p134 = por %p132, %p133
      %p135 = scmp.le.s32.totalorder 1, %s9
      %p136 = scmp.lt.s32.totalorder %s9, 3
      %p137 = pnand %p135, %p136
      %p138 = pneg %p137
      // Predicated region
      $region9: #{tpu_custom_call.1} parent=5 // pred_check
        _
      $region10: #{tpu_custom_call.1} parent=5 // pred_check_branch
        %140 = sbr.rel (%p137) target = $region12
      $region11: #{tpu_custom_call.1} parent=5 // pred_region
        %s141 = ssub.s32 %s9, 1
        // Predicated region
        $region13: #{tpu_custom_call.1} parent=11 // pred_check
          %p142 = pneg %p73
        $region14: #{tpu_custom_call.1} parent=11 // pred_check_branch
          %144 = sbr.rel (%p142) target = $region16
        $region15: #{tpu_custom_call.1} parent=11 // pred_region
          %p145 = scmp.lt.s32.totalorder %s19, 0
          %s146 = scalar_select %p145, %s19, 0
          %s147 = smul.addr %s146, 4
          %s148 = scalar_lea.vmem %s1, %s147
        $region16: #{tpu_custom_call.1} parent=11 // pred_fallthru
          _
        // Predicated region
        $region17: #{tpu_custom_call.1} parent=11 // pred_check
          %p149 = pneg %p99
        $region18: #{tpu_custom_call.1} parent=11 // pred_check_branch
          %151 = sbr.rel (%p149) target = $region20
        $region19: #{tpu_custom_call.1} parent=11 // pred_region
          %p152 = scmp.lt.s32.totalorder %s19, 0
          %s153 = scalar_select %p152, %s19, 0
          %s154 = scalar_lea.vmem %s2, %s153
        $region20: #{tpu_custom_call.1} parent=11 // pred_fallthru
          _
      $region12: #{tpu_custom_call.1} parent=5 // pred_fallthru
        _
      %p155 = scmp.lt.s32.totalorder %s9, 2
      // Predicated region
      $region21: #{tpu_custom_call.1} parent=5 // pred_check
        %p156 = pneg %p155
      $region22: #{tpu_custom_call.1} parent=5 // pred_check_branch
        %158 = sbr.rel (%p156) target = $region24
      $region23: #{tpu_custom_call.1} parent=5 // pred_region
        // Predicated region
        $region25: #{tpu_custom_call.1} parent=23 // pred_check
          %p159 = pneg %p41
        $region26: #{tpu_custom_call.1} parent=23 // pred_check_branch
          %161 = sbr.rel (%p159) target = $region28
        $region27: #{tpu_custom_call.1} parent=23 // pred_region
          %s162 = smul.u32 13, %s16
          %s163 = ssub.s32 25, %s162
          %p164 = scmp.lt.s32.totalorder %s163, 13
          %s165 = scalar_select %p164, %s163, 13
          %s166 = smul.u32 128, %s165
          %p167 = scmp.lt.s32.totalorder %s162, 24
          %s168 = scalar_select %p167, %s162, 24
          %s169 = smul.addr %s168, 8
          %s170 = scalar_lea.vmem %s0, %s169
          %s171 = smul.u32 13, %s16
          %s172 = ssub.s32 25, %s171
          %p173 = scmp.lt.s32.totalorder %s172, 13
          %s174 = scalar_select %p173, %s172, 13
          %s175 = smul.u32 128, %s174
        $region28: #{tpu_custom_call.1} parent=23 // pred_fallthru
          _
      $region24: #{tpu_custom_call.1} parent=5 // pred_fallthru
        _
      %p176 = scmp.le.s32.totalorder 1, %s9
      %p177 = scmp.lt.s32.totalorder %s9, 3
      %p178 = pnand %p176, %p177
      %p179 = pneg %p178
      // Predicated region
      $region29: #{tpu_custom_call.1} parent=5 // pred_check
        _
      $region30: #{tpu_custom_call.1} parent=5 // pred_check_branch
        %181 = sbr.rel (%p178) target = $region32
      $region31: #{tpu_custom_call.1} parent=5 // pred_region
        %s182 = ssub.s32 %s9, 1
        %s183 = smul.u32 13, %s18
        %s184 = ssub.s32 25, %s183
        %p185 = scmp.lt.s32.totalorder %s184, 13
        %s186 = scalar_select %p185, %s184, 13
        %s187 = smul.u32 128, %s186
        %p188 = scmp.lt.s32.totalorder %s183, 24
        %s189 = scalar_select %p188, %s183, 24
        %s190 = smul.addr %s189, 8
        %s191 = scalar_lea.vmem %s0, %s190
        %p192 = pneg %p47
        %p193 = pneg %p44
        %p194 = scmp.lt.s32.totalorder %s19, 0
        %s195 = scalar_select %p194, %s19, 0
        %s196 = smul.addr %s195, 4
        %s197 = scalar_lea.vmem %s1, %s196
        %p198 = pneg %p73
        %p199 = pneg %p70
        %p200 = scmp.lt.s32.totalorder %s19, 0
        %s201 = scalar_select %p200, %s19, 0
        %s202 = scalar_lea.vmem %s2, %s201
        %p203 = pneg %p99
        %p204 = pneg %p96
        %p205 = pneg %p127
        %p206 = pneg %p124
        %s207 = sand.u32 %s114, 1
        %s208 = sand.u32 %s114, 1
        %s209 = smul.addr %s208, 104
        %s210 = scalar_lea.vmem [#allocation2], %s209
        %s211 = smul.u32 13, %s18
        %s212 = ssub.s32 25, %s211
        %p213 = scmp.lt.s32.totalorder %s212, 13
        %s214 = scalar_select %p213, %s212, 13
        %s215 = smul.u32 128, %s214
        %p216 = scmp.lt.s32.totalorder %s211, 24
        %s217 = scalar_select %p216, %s211, 24
        %s218 = smul.addr %s217, 8
        %s219 = scalar_lea.vmem %s0, %s218
        %s220 = smul.u32 13, %s18
        %s221 = ssub.s32 25, %s220
        %p222 = scmp.lt.s32.totalorder %s221, 13
        %s223 = scalar_select %p222, %s221, 13
        %s224 = smul.u32 128, %s223
        %p225 = scmp.lt.s32.totalorder %s19, 0
        %s226 = scalar_select %p225, %s19, 0
        %s227 = smul.addr %s226, 4
        %s228 = scalar_lea.vmem %s1, %s227
        %p229 = scmp.lt.s32.totalorder %s19, 0
        %s230 = scalar_select %p229, %s19, 0
        %s231 = scalar_lea.vmem %s2, %s230
        %s232 = smul.u32 13, %s18
        %s233 = ssub.s32 25, %s232
        %p234 = scmp.lt.s32.totalorder %s233, 13
        %s235 = scalar_select %p234, %s233, 13
        %s236 = smul.u32 128, %s235
        %v238 = vld [vmem:[%s219] sm:$0xff]
        %v239 = vld [vmem:[%s219 + $0x8] sm:$0xff]
        %v240 = vld [vmem:[%s219 + $0x10] sm:$0xff]
        %v241 = vld [vmem:[%s219 + $0x18] sm:$0xff]
        %v242 = vld [vmem:[%s219 + $0x20] sm:$0xff]
        %v243 = vld [vmem:[%s219 + $0x28] sm:$0xff]
        %v244 = vld [vmem:[%s219 + $0x30] sm:$0xff]
        %v245 = vld [vmem:[%s219 + $0x38] sm:$0xff]
        %v246 = vld [vmem:[%s219 + $0x40] sm:$0xff]
        %v247 = vld [vmem:[%s219 + $0x48] sm:$0xff]
        %v248 = vld [vmem:[%s219 + $0x50] sm:$0xff]
        %v249 = vld [vmem:[%s219 + $0x58] sm:$0xff]
        %v250 = vld [vmem:[%s219 + $0x60] sm:$0xff]
        %v251 = vpack.c.bf16 %v239, %v238
        %v252 = vpack.c.bf16 %v241, %v240
        %v253 = vpack.c.bf16 %v243, %v242
        %v254 = vpack.c.bf16 %v245, %v244
        %v255 = vpack.c.bf16 %v247, %v246
        %v256 = vpack.c.bf16 %v249, %v248
        %v257 = vpack.c.bf16 %v250, %v250
        %v258 = vld [vmem:[%s228] sm:$0xf]
        %v259 = vld [vmem:[%s228 + $0x4] sm:$0xf]
        %v260 = vld [vmem:[%s228 + $0x8] sm:$0xf]
        %v261 = vld [vmem:[%s228 + $0xc] sm:$0xf]
        %v262 = vld [vmem:[%s228 + $0x10] sm:$0xf]
        %v263 = vld [vmem:[%s228 + $0x14] sm:$0xf]
        %v264 = vld [vmem:[%s228 + $0x18] sm:$0xf]
        %v265 = vld [vmem:[%s228 + $0x1c] sm:$0xf]
        %v266 = vld [vmem:[%s228 + $0x20] sm:$0xf]
        %v267 = vld [vmem:[%s228 + $0x24] sm:$0xf]
        %v268 = vld [vmem:[%s231] sm:$0x1]
        %v270 = vlaneseq
        %v271 = vshrl.u32 %v270, 7
        %v272 = vsub.s32 0, %v271
        %v273 = vrot.slane %v268, %v272
        %v285 = vunpack.c.l.b16 %v258
        %v286 = vunpack.c.l.b16 %v259
        %v287 = vunpack.c.l.b16 %v260
        %v288 = vunpack.c.l.b16 %v261
        %v289 = vunpack.c.l.b16 %v262
        %v290 = vunpack.c.l.b16 %v263
        %v291 = vunpack.c.l.b16 %v264
        %v292 = vunpack.c.l.b16 %v265
        %v293 = vunpack.c.l.b16 %v266
        %v294 = vunpack.c.l.b16 %v267
        %v295 = vpack.c.b16 %v286, %v285
        %v296 = vpack.c.b16 %v288, %v287
        %v297 = vpack.c.b16 %v290, %v289
        %v298 = vpack.c.b16 %v292, %v291
        %v299 = vpack.c.b16 %v294, %v293
        %vm305 = vcmask 654336
        %v307 = vsel %vm305, %v251, 0
        %v310 = vsel %vm305, %v252, 0
        %v313 = vsel %vm305, %v253, 0
        %v316 = vsel %vm305, %v254, 0
        %v319 = vsel %vm305, %v255, 0
        %v322 = vsel %vm305, %v256, 0
        %v325 = vsel %vm305, %v257, 0
        %327 = vmatprep.subr.bf16.mxu0 0
        %328 = vmatpush1.bf16.msra.mxu0 %v295
        %329 = vmatprep.subr.bf16.mxu0 0
        %330 = vmatpush1.bf16.msra.mxu0 %v296
        %331 = vmatprep.subr.bf16.mxu0 0
        %332 = vmatpush1.bf16.msra.mxu0 %v297
        %333 = vmatprep.subr.bf16.mxu0 0
        %334 = vmatpush1.bf16.msra.mxu0 %v298
        %335 = vmatprep.subr.bf16.mxu0 0
        %336 = vmatpush1.bf16.msra.mxu0 %v299
        %337 = vmatprep.subr.bf16.mxu0 0
        %338 = vmatpush1.bf16.msra.mxu0 0
        %339 = vmatprep.subr.bf16.mxu0 0
        %340 = vmatpush1.bf16.msra.mxu0 0
        %341 = vmatprep.subr.bf16.mxu0 0
        %342 = vmatpush1.bf16.msra.mxu0 0
        %343 = vmatprep.subr.bf16.mxu0 0
        %344 = vmatpush1.bf16.msra.mxu0 0
        %345 = vmatprep.subr.bf16.mxu0 0
        %346 = vmatpush1.bf16.msra.mxu0 0
        %347 = vmatprep.subr.bf16.mxu0 0
        %348 = vmatpush1.bf16.msra.mxu0 0
        %349 = vmatprep.subr.bf16.mxu0 0
        %350 = vmatpush1.bf16.msra.mxu0 0
        %351 = vmatprep.subr.bf16.mxu0 0
        %352 = vmatpush1.bf16.msra.mxu0 0
        %353 = vmatprep.subr.bf16.mxu0 0
        %354 = vmatpush1.bf16.msra.mxu0 0
        %355 = vmatprep.subr.bf16.mxu0 0
        %356 = vmatpush1.bf16.msra.mxu0 0
        %357 = vmatprep.subr.bf16.mxu0 0
        %358 = vmatpush1.bf16.msra.mxu0 0
        %359 = vmatprep.mubr.bf16.mxu0 0
        %360 = vmatmul.mubr.bf16.gmra.mrb[0].mxu0 %v307
        %v361 = vpop.f32.mrb[0].mxu0
        %v362 = vadd.f32 %v273, %v361
        %v363 = vpop.f32.mrb[0].mxu0
        %v364 = vpop.f32.mrb[0].mxu0
        %v365 = vadd.f32 %v273, %v364
        %v366 = vpop.f32.mrb[0].mxu0
        %367 = vmatprep.mubr.bf16.mxu0 0
        %368 = vmatmul.mubr.bf16.gmra.mrb[0].mxu0 %v310
        %v369 = vpop.f32.mrb[0].mxu0
        %v370 = vadd.f32 %v273, %v369
        %v371 = vpop.f32.mrb[0].mxu0
        %v372 = vpop.f32.mrb[0].mxu0
        %v373 = vadd.f32 %v273, %v372
        %v374 = vpop.f32.mrb[0].mxu0
        %375 = vmatprep.mubr.bf16.mxu0 0
        %376 = vmatmul.mubr.bf16.gmra.mrb[0].mxu0 %v313
        %v377 = vpop.f32.mrb[0].mxu0
        %v378 = vadd.f32 %v273, %v377
        %v379 = vpop.f32.mrb[0].mxu0
        %v380 = vpop.f32.mrb[0].mxu0
        %v381 = vadd.f32 %v273, %v380
        %v382 = vpop.f32.mrb[0].mxu0
        %383 = vmatprep.mubr.bf16.mxu0 0
        %384 = vmatmul.mubr.bf16.gmra.mrb[0].mxu0 %v316
        %v385 = vpop.f32.mrb[0].mxu0
        %v386 = vadd.f32 %v273, %v385
        %v387 = vpop.f32.mrb[0].mxu0
        %v388 = vpop.f32.mrb[0].mxu0
        %v389 = vadd.f32 %v273, %v388
        %v390 = vpop.f32.mrb[0].mxu0
        %391 = vmatprep.mubr.bf16.mxu0 0
        %392 = vmatmul.mubr.bf16.gmra.mrb[0].mxu0 %v319
        %v393 = vpop.f32.mrb[0].mxu0
        %v394 = vadd.f32 %v273, %v393
        %v395 = vpop.f32.mrb[0].mxu0
        %v396 = vpop.f32.mrb[0].mxu0
        %v397 = vadd.f32 %v273, %v396
        %v398 = vpop.f32.mrb[0].mxu0
        %399 = vmatprep.mubr.bf16.mxu0 0
        %400 = vmatmul.mubr.bf16.gmra.mrb[0].mxu0 %v322
        %v401 = vpop.f32.mrb[0].mxu0
        %v402 = vadd.f32 %v273, %v401
        %v403 = vpop.f32.mrb[0].mxu0
        %v404 = vpop.f32.mrb[0].mxu0
        %v405 = vadd.f32 %v273, %v404
        %v406 = vpop.f32.mrb[0].mxu0
        %407 = vmatprep.mubr.bf16.mxu0 0
        %408 = vmatmul.mubr.bf16.gmra.mrb[0].mxu0 %v325
        %v409 = vpop.f32.mrb[0].mxu0
        %v410 = vadd.f32 %v273, %v409
        %v411 = vpop.f32.mrb[0].mxu0
        %v412 = vpop.f32.mrb[0].mxu0
        %v413 = vpop.f32.mrb[0].mxu0
        %414 = vdwg.mxu0
        %v415 = vmax.f32 %v362, 0.0
        %v416 = vmax.f32 %v365, 0.0
        %v417 = vmax.f32 %v370, 0.0
        %v418 = vmax.f32 %v373, 0.0
        %v419 = vmax.f32 %v378, 0.0
        %v420 = vmax.f32 %v381, 0.0
        %v421 = vmax.f32 %v386, 0.0
        %v422 = vmax.f32 %v389, 0.0
        %v423 = vmax.f32 %v394, 0.0
        %v424 = vmax.f32 %v397, 0.0
        %v425 = vmax.f32 %v402, 0.0
        %v426 = vmax.f32 %v405, 0.0
        %v427 = vmax.f32 %v410, 0.0
        %vm428 = vcmask 785408
        %429 = vst.msk [vmem:[%s210] sm:$0xff] %vm428, %v415
        %430 = vst.msk [vmem:[%s210 + $0x8] sm:$0xff] %vm428, %v416
        %431 = vst.msk [vmem:[%s210 + $0x10] sm:$0xff] %vm428, %v417
        %432 = vst.msk [vmem:[%s210 + $0x18] sm:$0xff] %vm428, %v418
        %433 = vst.msk [vmem:[%s210 + $0x20] sm:$0xff] %vm428, %v419
        %434 = vst.msk [vmem:[%s210 + $0x28] sm:$0xff] %vm428, %v420
        %435 = vst.msk [vmem:[%s210 + $0x30] sm:$0xff] %vm428, %v421
        %436 = vst.msk [vmem:[%s210 + $0x38] sm:$0xff] %vm428, %v422
        %437 = vst.msk [vmem:[%s210 + $0x40] sm:$0xff] %vm428, %v423
        %438 = vst.msk [vmem:[%s210 + $0x48] sm:$0xff] %vm428, %v424
        %439 = vst.msk [vmem:[%s210 + $0x50] sm:$0xff] %vm428, %v425
        %440 = vst.msk [vmem:[%s210 + $0x58] sm:$0xff] %vm428, %v426
        %441 = vst.msk [vmem:[%s210 + $0x60] sm:$0xff] %vm428, %v427
        %s442 = sand.u32 %s114, 1
        %s443 = sand.u32 %s114, 1
        %s444 = smul.addr %s443, 104
        %s445 = scalar_lea.vmem [#allocation2], %s444
        // Predicated region
        $region33: #{tpu_custom_call.1} parent=31 // pred_check
          %p446 = pneg %p124
        $region34: #{tpu_custom_call.1} parent=31 // pred_check_branch
          %448 = sbr.rel (%p446) target = $region36
        $region35: #{tpu_custom_call.1} parent=31 // pred_region
          %s449 = smul.u32 13, %s18
          %s450 = ssub.s32 25, %s449
          %p451 = scmp.lt.s32.totalorder %s450, 13
          %s452 = scalar_select %p451, %s450, 13
          %s453 = smul.u32 128, %s452
          %p454 = scmp.ne.s32.totalorder 0, %s453
          %s455 = sadd.s32 %s19, %s449
          %s456 = smul.addr %s455, 8
          %s457 = scalar_lea.vmem %s3, %s456
          // Predicated region
          $region37: #{tpu_custom_call.1} parent=35 // pred_check
            %p458 = pneg %p454
          $region38: #{tpu_custom_call.1} parent=35 // pred_check_branch
            %460 = sbr.rel (%p458) target = $region40
          $region39: #{tpu_custom_call.1} parent=35 // pred_region
            // Predicated region
            $region41: #{tpu_custom_call.1} parent=39 // pred_check
              _
            $region42: #{tpu_custom_call.1} parent=39 // pred_check_branch
              %462 = sbr.rel (0) target = $region44
            $region43: #{tpu_custom_call.1} parent=39 // pred_region
              // Predicated region
              $region63: #{tpu_custom_call.1} parent=43 // pred_check
                _
              $region64: #{tpu_custom_call.1} parent=43 // pred_check_branch
                %536 = sbr.rel (0) target = $region66
              $region65: #{tpu_custom_call.1} parent=43 // pred_region
                %s537 = sdiv.u32.pop %s452, 13
                %s538 = srem.u32.pop %s452, 13
                // While loop
                $region67: #{tpu_custom_call.1} parent=65 // loop_pre_header
                  _
                $region68: #{tpu_custom_call.1} parent=65 // loop_header
                  %s540 = sphi 0, %s542
                  %p541 = scmp.ge.s32.totalorder %s540, %s537
                  %s545 = sphi 0, %s576
                  %s546 = sphi %s445, %s579
                  %s547 = sphi %s457, %s580
                $region69: #{tpu_custom_call.1} parent=65 // loop_header_branch
                  %544 = sbr.rel (%p541) target = $region73
                $region70: #{tpu_custom_call.1} parent=65 // loop_body
                  %v548 = vld [vmem:[%s546] sm:$0xff]
                  %549 = vst [vmem:[%s547] sm:$0xff] %v548
                  %v550 = vld [vmem:[%s546 + $0x8] sm:$0xff]
                  %551 = vst [vmem:[%s547 + $0x8] sm:$0xff] %v550
                  %v552 = vld [vmem:[%s546 + $0x10] sm:$0xff]
                  %553 = vst [vmem:[%s547 + $0x10] sm:$0xff] %v552
                  %v554 = vld [vmem:[%s546 + $0x18] sm:$0xff]
                  %555 = vst [vmem:[%s547 + $0x18] sm:$0xff] %v554
                  %v556 = vld [vmem:[%s546 + $0x20] sm:$0xff]
                  %557 = vst [vmem:[%s547 + $0x20] sm:$0xff] %v556
                  %v558 = vld [vmem:[%s546 + $0x28] sm:$0xff]
                  %559 = vst [vmem:[%s547 + $0x28] sm:$0xff] %v558
                  %v560 = vld [vmem:[%s546 + $0x30] sm:$0xff]
                  %561 = vst [vmem:[%s547 + $0x30] sm:$0xff] %v560
                  %v562 = vld [vmem:[%s546 + $0x38] sm:$0xff]
                  %563 = vst [vmem:[%s547 + $0x38] sm:$0xff] %v562
                  %v564 = vld [vmem:[%s546 + $0x40] sm:$0xff]
                  %565 = vst [vmem:[%s547 + $0x40] sm:$0xff] %v564
                  %v566 = vld [vmem:[%s546 + $0x48] sm:$0xff]
                  %567 = vst [vmem:[%s547 + $0x48] sm:$0xff] %v566
                  %v568 = vld [vmem:[%s546 + $0x50] sm:$0xff]
                  %569 = vst [vmem:[%s547 + $0x50] sm:$0xff] %v568
                  %v570 = vld [vmem:[%s546 + $0x58] sm:$0xff]
                  %571 = vst [vmem:[%s547 + $0x58] sm:$0xff] %v570
                  %v572 = vld [vmem:[%s546 + $0x60] sm:$0xff]
                  %573 = vst [vmem:[%s547 + $0x60] sm:$0xff] %v572
                  %s574 = sadd.s32 1, %s545
                  %p575 = scmp.ge.s32.totalorder %s574, %s537
                  %s576 = scalar_select %p575, 0, %s574
                  %s577 = smul.u32 %s576, 104
                  %s578 = smul.u32 %s576, 104
                  %s579 = scalar_lea.vmem %s445, %s577 [#allocation2]
                  %s580 = scalar_lea.vmem %s457, %s578
                $region71: #{tpu_custom_call.1} parent=65 // loop_footer
                  %s542 = sadd.s32 %s540, 1
                $region72: #{tpu_custom_call.1} parent=65 // loop_footer_branch
                  %539 = sbr.rel target = $region68
                $region73: #{tpu_custom_call.1} parent=65 // loop_exit
                  _
                %s581 = sdiv.u32.pop %s452, 13
                %s582 = srem.u32.pop %s452, 13
                %s583 = smul.u32 %s581, 13
                %s584 = smul.u32 8, %s583
                %s585 = scalar_lea.vmem %s445, %s584 [#allocation2]
                %s586 = smul.u32 8, %s583
                %s587 = scalar_lea.vmem %s457, %s586
                // While loop
                $region74: #{tpu_custom_call.1} parent=65 // loop_pre_header
                  _
                $region75: #{tpu_custom_call.1} parent=65 // loop_header
                  %s589 = sphi 0, %s591
                  %p590 = scmp.ge.s32.totalorder %s589, %s582
                  %s594 = sphi 0, %s601
                  %s595 = sphi %s585, %s604
                  %s596 = sphi %s587, %s605
                $region76: #{tpu_custom_call.1} parent=65 // loop_header_branch
                  %593 = sbr.rel (%p590) target = $region80
                $region77: #{tpu_custom_call.1} parent=65 // loop_body
                  %v597 = vld [vmem:[%s595] sm:$0xff]
                  %598 = vst [vmem:[%s596] sm:$0xff] %v597
                  %s599 = sadd.s32 1, %s594
                  %p600 = scmp.ge.s32.totalorder %s599, %s582
                  %s601 = scalar_select %p600, 0, %s599
                  %s602 = smul.u32 %s601, 8
                  %s603 = smul.u32 %s601, 8
                  %s604 = scalar_lea.vmem %s585, %s602 [#allocation2]
                  %s605 = scalar_lea.vmem %s587, %s603
                $region78: #{tpu_custom_call.1} parent=65 // loop_footer
                  %s591 = sadd.s32 %s589, 1
                $region79: #{tpu_custom_call.1} parent=65 // loop_footer_branch
                  %588 = sbr.rel target = $region75
                $region80: #{tpu_custom_call.1} parent=65 // loop_exit
                  _
              $region66: #{tpu_custom_call.1} parent=43 // pred_fallthru
                _
              // Predicated region
              $region81: #{tpu_custom_call.1} parent=43 // pred_check
                _
              $region82: #{tpu_custom_call.1} parent=43 // pred_check_branch
                %607 = sbr.rel target = $region84
              $region83: #{tpu_custom_call.1} parent=43 // pred_region
                _
              $region84: #{tpu_custom_call.1} parent=43 // pred_fallthru
                _
            $region44: #{tpu_custom_call.1} parent=39 // pred_fallthru
              _
            // Predicated region
            $region45: #{tpu_custom_call.1} parent=39 // pred_check
              _
            $region46: #{tpu_custom_call.1} parent=39 // pred_check_branch
              %464 = sbr.rel target = $region48
            $region47: #{tpu_custom_call.1} parent=39 // pred_region
              %s466 = sdiv.u32.pop %s452, 13
              %s467 = srem.u32.pop %s452, 13
              // While loop
              $region49: #{tpu_custom_call.1} parent=47 // loop_pre_header
                _
              $region50: #{tpu_custom_call.1} parent=47 // loop_header
                %s469 = sphi 0, %s471
                %p470 = scmp.ge.s32.totalorder %s469, %s466
                %s474 = sphi 0, %s505
                %s475 = sphi %s445, %s508
                %s476 = sphi %s457, %s509
              $region51: #{tpu_custom_call.1} parent=47 // loop_header_branch
                %473 = sbr.rel (%p470) target = $region55
              $region52: #{tpu_custom_call.1} parent=47 // loop_body
                %v477 = vld [vmem:[%s475] sm:$0xff]
                %478 = vst [vmem:[%s476] sm:$0xff] %v477
                %v479 = vld [vmem:[%s475 + $0x8] sm:$0xff]
                %480 = vst [vmem:[%s476 + $0x8] sm:$0xff] %v479
                %v481 = vld [vmem:[%s475 + $0x10] sm:$0xff]
                %482 = vst [vmem:[%s476 + $0x10] sm:$0xff] %v481
                %v483 = vld [vmem:[%s475 + $0x18] sm:$0xff]
                %484 = vst [vmem:[%s476 + $0x18] sm:$0xff] %v483
                %v485 = vld [vmem:[%s475 + $0x20] sm:$0xff]
                %486 = vst [vmem:[%s476 + $0x20] sm:$0xff] %v485
                %v487 = vld [vmem:[%s475 + $0x28] sm:$0xff]
                %488 = vst [vmem:[%s476 + $0x28] sm:$0xff] %v487
                %v489 = vld [vmem:[%s475 + $0x30] sm:$0xff]
                %490 = vst [vmem:[%s476 + $0x30] sm:$0xff] %v489
                %v491 = vld [vmem:[%s475 + $0x38] sm:$0xff]
                %492 = vst [vmem:[%s476 + $0x38] sm:$0xff] %v491
                %v493 = vld [vmem:[%s475 + $0x40] sm:$0xff]
                %494 = vst [vmem:[%s476 + $0x40] sm:$0xff] %v493
                %v495 = vld [vmem:[%s475 + $0x48] sm:$0xff]
                %496 = vst [vmem:[%s476 + $0x48] sm:$0xff] %v495
                %v497 = vld [vmem:[%s475 + $0x50] sm:$0xff]
                %498 = vst [vmem:[%s476 + $0x50] sm:$0xff] %v497
                %v499 = vld [vmem:[%s475 + $0x58] sm:$0xff]
                %500 = vst [vmem:[%s476 + $0x58] sm:$0xff] %v499
                %v501 = vld [vmem:[%s475 + $0x60] sm:$0xff]
                %502 = vst [vmem:[%s476 + $0x60] sm:$0xff] %v501
                %s503 = sadd.s32 1, %s474
                %p504 = scmp.ge.s32.totalorder %s503, %s466
                %s505 = scalar_select %p504, 0, %s503
                %s506 = smul.u32 %s505, 104
                %s507 = smul.u32 %s505, 104
                %s508 = scalar_lea.vmem %s445, %s506 [#allocation2]
                %s509 = scalar_lea.vmem %s457, %s507
              $region53: #{tpu_custom_call.1} parent=47 // loop_footer
                %s471 = sadd.s32 %s469, 1
              $region54: #{tpu_custom_call.1} parent=47 // loop_footer_branch
                %468 = sbr.rel target = $region50
              $region55: #{tpu_custom_call.1} parent=47 // loop_exit
                _
              %s510 = sdiv.u32.pop %s452, 13
              %s511 = srem.u32.pop %s452, 13
              %s512 = smul.u32 %s510, 13
              %s513 = smul.u32 8, %s512
              %s514 = scalar_lea.vmem %s445, %s513 [#allocation2]
              %s515 = smul.u32 8, %s512
              %s516 = scalar_lea.vmem %s457, %s515
              // While loop
              $region56: #{tpu_custom_call.1} parent=47 // loop_pre_header
                _
              $region57: #{tpu_custom_call.1} parent=47 // loop_header
                %s518 = sphi 0, %s520
                %p519 = scmp.ge.s32.totalorder %s518, %s511
                %s523 = sphi 0, %s530
                %s524 = sphi %s514, %s533
                %s525 = sphi %s516, %s534
              $region58: #{tpu_custom_call.1} parent=47 // loop_header_branch
                %522 = sbr.rel (%p519) target = $region62
              $region59: #{tpu_custom_call.1} parent=47 // loop_body
                %v526 = vld [vmem:[%s524] sm:$0xff]
                %527 = vst [vmem:[%s525] sm:$0xff] %v526
                %s528 = sadd.s32 1, %s523
                %p529 = scmp.ge.s32.totalorder %s528, %s511
                %s530 = scalar_select %p529, 0, %s528
                %s531 = smul.u32 %s530, 8
                %s532 = smul.u32 %s530, 8
                %s533 = scalar_lea.vmem %s514, %s531 [#allocation2]
                %s534 = scalar_lea.vmem %s516, %s532
              $region60: #{tpu_custom_call.1} parent=47 // loop_footer
                %s520 = sadd.s32 %s518, 1
              $region61: #{tpu_custom_call.1} parent=47 // loop_footer_branch
                %517 = sbr.rel target = $region57
              $region62: #{tpu_custom_call.1} parent=47 // loop_exit
                _
            $region48: #{tpu_custom_call.1} parent=39 // pred_fallthru
              _
          $region40: #{tpu_custom_call.1} parent=35 // pred_fallthru
            _
          %608 = vnop
        $region36: #{tpu_custom_call.1} parent=31 // pred_fallthru
          _
      $region32: #{tpu_custom_call.1} parent=5 // pred_fallthru
        _
      %p609 = scmp.le.s32.totalorder 2, %s9
      // Predicated region
      $region85: #{tpu_custom_call.1} parent=5 // pred_check
        %p610 = pneg %p609
      $region86: #{tpu_custom_call.1} parent=5 // pred_check_branch
        %612 = sbr.rel (%p610) target = $region88
      $region87: #{tpu_custom_call.1} parent=5 // pred_region
        %s613 = ssub.s32 %s9, 2
        // Predicated region
        $region89: #{tpu_custom_call.1} parent=87 // pred_check
          %p614 = pneg %p130
        $region90: #{tpu_custom_call.1} parent=87 // pred_check_branch
          %616 = sbr.rel (%p614) target = $region92
        $region91: #{tpu_custom_call.1} parent=87 // pred_region
          %s617 = sand.u32 %s115, 1
          %s618 = sand.u32 %s115, 1
          %s619 = smul.addr %s618, 104
          %s620 = scalar_lea.vmem [#allocation2], %s619
        $region92: #{tpu_custom_call.1} parent=87 // pred_fallthru
          _
      $region88: #{tpu_custom_call.1} parent=5 // pred_fallthru
        _
    $region6: #{tpu_custom_call.1} parent=1 // loop_footer
      %s13 = sadd.s32 1, %s9
    $region7: #{tpu_custom_call.1} parent=1 // loop_footer_branch
      %8 = sbr.rel target = $region3
    $region8: #{tpu_custom_call.1} parent=1 // loop_exit
      _

</llo_original>
